<compile_context>
chip_gen: v7x
topology: tpu7x:2x2x1
jax: 0.10.0
libtpu: 0.0.40
codegen_flags: <defaults>
</compile_context>

<pallas_src>
import functools

import jax
import jax.numpy as jnp
from jax.experimental import pallas as pl
from jax.experimental.pallas import tpu as pltpu

EPS = 1e-5  # PyTorch nn.LayerNorm default eps


def _layernorm(x, gamma, beta):
    # Single-pass: one reduction pair instead of mean + centered-variance pass.
    mu = jnp.mean(x, axis=-1, keepdims=True)
    msq = jnp.mean(x * x, axis=-1, keepdims=True)
    var = jnp.maximum(msq - mu * mu, 0.0)
    return (x - mu) * jax.lax.rsqrt(var + EPS) * gamma + beta


def _round_up(n, m):
    return (n + m - 1) // m * m


def mlp_layer_kernel(x_ref, g1_ref, be1_ref, w1_ref, b1_ref,
                     w2_ref, b2_ref, g2_ref, be2_ref, out_ref,
                     xn_ref, xn_lo_ref, acc_ref, *, matmul_dtype):
    f = pl.program_id(1)

    # First d_ff block of this token tile: LayerNorm1 once (f32 for the
    # residual, bf16 cache for the MXU), zero the accumulator.
    # Padded rows (all zeros) give var=0 -> rsqrt(eps): large but finite values
    # that are sliced off in the wrapper; do NOT "fix" this into a NaN path.
    @pl.when(f == 0)
    def _():
        x = x_ref[...].astype(jnp.float32)
        xn = _layernorm(x, g1_ref[...], be1_ref[...])
        xn_ref[...] = xn
        xn_lo_ref[...] = xn.astype(matmul_dtype)
        acc_ref[...] = jnp.zeros_like(acc_ref)

    # Partial MLP over this d_ff block: bf16 operands, f32 accumulation.
    b1 = b1_ref[...]                                              # (1, tf) f32
    h = jnp.dot(xn_lo_ref[...], w1_ref[...],
                preferred_element_type=jnp.float32) + b1
    h = jnp.maximum(h, 0.0).astype(matmul_dtype)                  # relu; dropout p=0 no-op
    acc_ref[...] += jnp.dot(h, w2_ref[...], preferred_element_type=jnp.float32)

    # Last d_ff block: bias, residual against the *normed* x, LayerNorm2, store.
    @pl.when(f == pl.num_programs(1) - 1)
    def _():
        y = acc_ref[...] + b2_ref[...]
        z = xn_ref[...] + y
        out_ref[...] = _layernorm(z, g2_ref[...], be2_ref[...]).astype(out_ref.dtype)


def _vmem_budget_bytes():
    """~3/4 of physical per-core VMEM; conservative fallback if query fails."""
    cap = 64 * 1024 * 1024
    try:
        info = pltpu.get_tpu_info()
        cap = int(getattr(info, "vmem_capacity_bytes", cap))
    except Exception:
        pass
    return (cap * 3) // 4


def _choose_tf(F, D, tm_eff, tf_target, budget):
    """Pick the d_ff tile. Full F (weight-resident) if it fits the budget,
    else the largest 128-multiple divisor of F <= tf_target that fits."""
    def vmem_bytes(tf):
        weights = 2 * 2 * D * tf * 2           # W1 + W2, double-buffered, bf16
        acts = 2 * 2 * tm_eff * D * 4          # x-in + out tiles, double-buffered f32
        scratch = tm_eff * D * (4 + 2 + 4)     # xn f32 + xn bf16 + acc f32
        tmp = tm_eff * tf * 4                  # relu(h) intermediate headroom
        return weights + acts + scratch + tmp

    if vmem_bytes(F) <= budget:
        return F                               # weights stay VMEM-resident
    best = None
    t = 128
    while t <= min(F, tf_target):
        if F % t == 0 and vmem_bytes(t) <= budget:
            best = t
        t += 128
    if best is not None:
        return best
    # TODO(synk): pad F + mask for awkward F with no fitting 128-multiple divisor.
    for t in range(128, F + 1, 128):
        if F % t == 0:
            return t
    return F


def mlp_layer(x, params, *, tm=512, tf=2048, matmul_dtype=jnp.bfloat16,
              vmem_budget_bytes=None):
    """x: [B, L, d_model]. params: dict of weights (see init_params).

    W1/W2 should already be in `matmul_dtype` (init_params stores bf16); the
    cast below is a no-op in that case, so no extra HBM pass per call.
    """
    B, L, D = x.shape
    F = params["w1"].shape[1]
    N = B * L

    w1 = params["w1"]
    w2 = params["w2"]
    if w1.dtype != matmul_dtype:
        w1 = w1.astype(matmul_dtype)
    if w2.dtype != matmul_dtype:
        w2 = w2.astype(matmul_dtype)

    if vmem_budget_bytes is None:
        vmem_budget_bytes = _vmem_budget_bytes()

    # Token tiling: up to `tm` rows per tile (sublane aligned). Keep >= 2 token
    # tiles when possible so both v7x TensorCores get work on the parallel axis.
    tm_eff = min(tm, _round_up(N, 8))
    if N > 8 and _round_up(N, tm_eff) // tm_eff < 2:
        tm_eff = _round_up((N + 1) // 2, 8)
    n_pad = _round_up(N, tm_eff)

    tf_eff = _choose_tf(F, D, tm_eff, tf, vmem_budget_bytes)

    x2 = x.reshape(N, D)
    if n_pad != N:
        x2 = jnp.pad(x2, ((0, n_pad - N), (0, 0)))

    row = lambda v: v.reshape(1, -1)          # TPU-friendly 2-D views
    const = lambda shape: pl.BlockSpec(shape, lambda i, f: (0, 0))

    # Scoped VMEM limit: the budget itself (48 MiB on v7x, 96 MiB on v5e/v6e),
    # never below the 32 MiB default so tiny forced budgets still compile.
    vmem_limit = max(int(vmem_budget_bytes), 32 * 1024 * 1024)

    out2 = pl.pallas_call(
        functools.partial(mlp_layer_kernel, matmul_dtype=matmul_dtype),
        out_shape=jax.ShapeDtypeStruct((n_pad, D), x.dtype),
        grid_spec=pltpu.PrefetchScalarGridSpec(
            num_scalar_prefetch=0,
            grid=(n_pad // tm_eff, F // tf_eff),     # reduction (d_ff) axis last
            in_specs=[
                pl.BlockSpec((tm_eff, D), lambda i, f: (i, 0)),   # x tile
                const((1, D)),                                    # norm1 gamma
                const((1, D)),                                    # norm1 beta
                pl.BlockSpec((D, tf_eff), lambda i, f: (0, f)),   # W1 block
                pl.BlockSpec((1, tf_eff), lambda i, f: (0, f)),   # b1 block
                pl.BlockSpec((tf_eff, D), lambda i, f: (f, 0)),   # W2 block
                const((1, D)),                                    # b2
                const((1, D)),                                    # norm2 gamma
                const((1, D)),                                    # norm2 beta
            ],
            out_specs=pl.BlockSpec((tm_eff, D), lambda i, f: (i, 0)),
            scratch_shapes=[
                pltpu.VMEM((tm_eff, D), jnp.float32),   # LayerNorm1(x), f32 (residual)
                pltpu.VMEM((tm_eff, D), matmul_dtype),  # LayerNorm1(x), bf16 (MXU LHS)
                pltpu.VMEM((tm_eff, D), jnp.float32),   # f32 accumulator for y
            ],
        ),
        compiler_params=pltpu.CompilerParams(
            dimension_semantics=("parallel", "arbitrary"),
            vmem_limit_bytes=vmem_limit,
        ),
    )(x2,
      row(params["g1"]), row(params["be1"]),
      w1, row(params["b1"]),
      w2, row(params["b2"]),
      row(params["g2"]), row(params["be2"]))

    return out2[:N].reshape(B, L, D)


def init_params(key, d_model, d_ff, matmul_dtype=jnp.bfloat16):
    """Deterministic synthetic init. Conv1d(k=1) weight [out, in, 1] is stored
    transposed as [in, out] so the kernel can do x @ W. W1/W2 are stored in
    `matmul_dtype` (bf16) so no per-call cast / extra HBM pass is needed."""
    k1, k2, k3, k4 = jax.random.split(key, 4)
    s1 = 1.0 / jnp.sqrt(d_model)
    s2 = 1.0 / jnp.sqrt(d_ff)
    return {
        "g1":  jnp.ones((d_model,), jnp.float32),
        "be1": jnp.zeros((d_model,), jnp.float32),
        "w1":  jax.random.uniform(k1, (d_model, d_ff), jnp.float32, -s1, s1
                                  ).astype(matmul_dtype),
        "b1":  jax.random.uniform(k2, (d_ff,), jnp.float32, -s1, s1),
        "w2":  jax.random.uniform(k3, (d_ff, d_model), jnp.float32, -s2, s2
                                  ).astype(matmul_dtype),
        "b2":  jax.random.uniform(k4, (d_model,), jnp.float32, -s2, s2),
        "g2":  jnp.ones((d_model,), jnp.float32),
        "be2": jnp.zeros((d_model,), jnp.float32),
    }


def mlp_layer_ref(x, p):
    """Pure-JAX reference mirroring the PyTorch forward (k=1, relu, res_con).
    Uses the same (bf16-stored) weights; activations stay f32."""
    xn = _layernorm(x, p["g1"], p["be1"])
    h = jnp.maximum(xn @ p["w1"].astype(jnp.float32) + p["b1"], 0.0)
    y = h @ p["w2"].astype(jnp.float32) + p["b2"]
    return _layernorm(xn + y, p["g2"], p["be2"])


if __name__ == "__main__":
    key = jax.random.PRNGKey(0)

    # Test 1: small module-like shapes (d_model below a lane tile; correctness only).
    B, L, d_model, d_ff = 2, 8, 32, 64
    kx, kp, key = jax.random.split(key, 3)
    x = jax.random.normal(kx, (B, L, d_model), jnp.float32)
    params = init_params(kp, d_model, d_ff)
    out = jax.block_until_ready(mlp_layer(x, params))
    ref = mlp_layer_ref(x, params)
    assert out.shape == (B, L, d_model)
    assert jnp.allclose(out, ref, atol=3e-2, rtol=3e-2)  # bf16 matmul tolerance

    # Test 2: lane-aligned shapes; default budget -> weight-resident full-F
    # path (grid = (2, 1), weight blocks constant, no re-streaming).
    B2, L2, dm2, dff2 = 2, 256, 128, 1024
    kx2, kp2 = jax.random.split(key)
    x2 = jax.random.normal(kx2, (B2, L2, dm2), jnp.float32)
    params2 = init_params(kp2, dm2, dff2)
    out2 = jax.block_until_ready(mlp_layer(x2, params2))
    ref2 = mlp_layer_ref(x2, params2)
    assert out2.shape == (B2, L2, dm2)
    assert jnp.allclose(out2, ref2, atol=3e-2, rtol=3e-2)

    # Test 3: same data with a tiny forced VMEM budget to exercise the tiled
    # d_ff reduction path (tf_eff=512, grid = (2, 2)).
    out3 = jax.block_until_ready(
        mlp_layer(x2, params2, vmem_budget_bytes=int(2.5 * 1024 * 1024)))
    assert jnp.allclose(out3, ref2, atol=3e-2, rtol=3e-2)

    print("KERNEL_OK")
</pallas_src>

<mosaic_0001>
module attributes {stable_mosaic.version = 11 : i64} {
  func.func @mlp_layer_kernel(%arg0: i32, %arg1: i32, %arg2: memref<8x32xf32, #tpu.memory_space<vmem>>, %arg3: memref<1x32xf32, #tpu.memory_space<vmem>>, %arg4: memref<1x32xf32, #tpu.memory_space<vmem>>, %arg5: memref<32x64xbf16, #tpu.memory_space<vmem>>, %arg6: memref<1x64xf32, #tpu.memory_space<vmem>>, %arg7: memref<64x32xbf16, #tpu.memory_space<vmem>>, %arg8: memref<1x32xf32, #tpu.memory_space<vmem>>, %arg9: memref<1x32xf32, #tpu.memory_space<vmem>>, %arg10: memref<1x32xf32, #tpu.memory_space<vmem>>, %arg11: memref<8x32xf32, #tpu.memory_space<vmem>>, %arg12: memref<8x32xf32, #tpu.memory_space<vmem>>, %arg13: memref<8x32xbf16, #tpu.memory_space<vmem>>, %arg14: memref<8x32xf32, #tpu.memory_space<vmem>>) attributes {dimension_semantics = [#tpu.dimension_semantics<parallel>, #tpu.dimension_semantics<arbitrary>], iteration_bounds = array<i64: 2, 1>, scalar_prefetch = 0 : i64, scratch_operands = 3 : i64, tpu.core_type = #tpu.core_type<tc>, window_params = [{transform_indices = @transform_0, window_bounds = array<i64: 8, 32>}, {pipeline_mode = #tpu.pipeline_mode<synchronous>, transform_indices = @transform_1, window_bounds = array<i64: 1, 32>}, {pipeline_mode = #tpu.pipeline_mode<synchronous>, transform_indices = @transform_2, window_bounds = array<i64: 1, 32>}, {transform_indices = @transform_3, window_bounds = array<i64: 32, 64>}, {transform_indices = @transform_4, window_bounds = array<i64: 1, 64>}, {transform_indices = @transform_5, window_bounds = array<i64: 64, 32>}, {pipeline_mode = #tpu.pipeline_mode<synchronous>, transform_indices = @transform_6, window_bounds = array<i64: 1, 32>}, {pipeline_mode = #tpu.pipeline_mode<synchronous>, transform_indices = @transform_7, window_bounds = array<i64: 1, 32>}, {pipeline_mode = #tpu.pipeline_mode<synchronous>, transform_indices = @transform_8, window_bounds = array<i64: 1, 32>}, {transform_indices = @transform_9, window_bounds = array<i64: 8, 32>}]} {
    %c0_i32 = arith.constant 0 : i32
    %0 = arith.cmpi eq, %arg1, %c0_i32 : i32
    %1 = arith.extui %0 : i1 to i32
    %c0_i32_0 = arith.constant 0 : i32
    %2 = arith.cmpi ne, %1, %c0_i32_0 : i32
    scf.if %2 {
      %c0_16 = arith.constant 0 : index
      %c0_17 = arith.constant 0 : index
      %20 = vector.load %arg2[%c0_16, %c0_17] : memref<8x32xf32, #tpu.memory_space<vmem>>, vector<8x32xf32>
      %c0_18 = arith.constant 0 : index
      %c0_19 = arith.constant 0 : index
      %21 = vector.load %arg3[%c0_18, %c0_19] : memref<1x32xf32, #tpu.memory_space<vmem>>, vector<1x32xf32>
      %c0_20 = arith.constant 0 : index
      %c0_21 = arith.constant 0 : index
      %22 = vector.load %arg4[%c0_20, %c0_21] : memref<1x32xf32, #tpu.memory_space<vmem>>, vector<1x32xf32>
      %cst_22 = arith.constant dense<0.000000e+00> : vector<8xf32>
      %23 = vector.multi_reduction <add>, %20, %cst_22 [1] : vector<8x32xf32> to vector<8xf32>
      %24 = vector.shape_cast %23 : vector<8xf32> to vector<8x1xf32>
      %cst_23 = arith.constant 3.200000e+01 : f32
      %25 = vector.broadcast %cst_23 : f32 to vector<8x1xf32>
      %26 = arith.divf %24, %25 : vector<8x1xf32>
      %27 = arith.mulf %20, %20 : vector<8x32xf32>
      %cst_24 = arith.constant dense<0.000000e+00> : vector<8xf32>
      %28 = vector.multi_reduction <add>, %27, %cst_24 [1] : vector<8x32xf32> to vector<8xf32>
      %29 = vector.shape_cast %28 : vector<8xf32> to vector<8x1xf32>
      %cst_25 = arith.constant 3.200000e+01 : f32
      %30 = vector.broadcast %cst_25 : f32 to vector<8x1xf32>
      %31 = arith.divf %29, %30 : vector<8x1xf32>
      %32 = arith.mulf %26, %26 : vector<8x1xf32>
      %33 = arith.subf %31, %32 : vector<8x1xf32>
      %cst_26 = arith.constant 0.000000e+00 : f32
      %34 = vector.broadcast %cst_26 : f32 to vector<8x1xf32>
      %35 = arith.maximumf %33, %34 : vector<8x1xf32>
      %36 = vector.broadcast %26 : vector<8x1xf32> to vector<8x32xf32>
      %37 = arith.subf %20, %36 : vector<8x32xf32>
      %cst_27 = arith.constant 9.99999974E-6 : f32
      %38 = vector.broadcast %cst_27 : f32 to vector<8x1xf32>
      %39 = arith.addf %35, %38 : vector<8x1xf32>
      %40 = math.rsqrt %39 : vector<8x1xf32>
      %41 = vector.broadcast %40 : vector<8x1xf32> to vector<8x32xf32>
      %42 = arith.mulf %37, %41 : vector<8x32xf32>
      %43 = vector.broadcast %21 : vector<1x32xf32> to vector<8x32xf32>
      %44 = arith.mulf %42, %43 : vector<8x32xf32>
      %45 = vector.broadcast %22 : vector<1x32xf32> to vector<8x32xf32>
      %46 = arith.addf %44, %45 : vector<8x32xf32>
      %c0_28 = arith.constant 0 : index
      %c0_29 = arith.constant 0 : index
      %47 = vector.load %arg12[%c0_28, %c0_29] : memref<8x32xf32, #tpu.memory_space<vmem>>, vector<8x32xf32>
      tpu.vector_store %arg12[%c0_28, %c0_29], %46 {strides = array<i32>} : memref<8x32xf32, #tpu.memory_space<vmem>>, vector<8x32xf32>,
      %48 = arith.truncf %46 : vector<8x32xf32> to vector<8x32xbf16>
      %c0_30 = arith.constant 0 : index
      %c0_31 = arith.constant 0 : index
      %49 = vector.load %arg13[%c0_30, %c0_31] : memref<8x32xbf16, #tpu.memory_space<vmem>>, vector<8x32xbf16>
      tpu.vector_store %arg13[%c0_30, %c0_31], %48 {strides = array<i32>} : memref<8x32xbf16, #tpu.memory_space<vmem>>, vector<8x32xbf16>,
      %cst_32 = arith.constant 0.000000e+00 : f32
      %50 = vector.broadcast %cst_32 : f32 to vector<8x32xf32>
      %c0_33 = arith.constant 0 : index
      %c0_34 = arith.constant 0 : index
      %51 = vector.load %arg14[%c0_33, %c0_34] : memref<8x32xf32, #tpu.memory_space<vmem>>, vector<8x32xf32>
      tpu.vector_store %arg14[%c0_33, %c0_34], %50 {strides = array<i32>} : memref<8x32xf32, #tpu.memory_space<vmem>>, vector<8x32xf32>,
    } else {
    }
    %c0 = arith.constant 0 : index
    %c0_1 = arith.constant 0 : index
    %3 = vector.load %arg6[%c0, %c0_1] : memref<1x64xf32, #tpu.memory_space<vmem>>, vector<1x64xf32>
    %c0_2 = arith.constant 0 : index
    %c0_3 = arith.constant 0 : index
    %4 = vector.load %arg13[%c0_2, %c0_3] : memref<8x32xbf16, #tpu.memory_space<vmem>>, vector<8x32xbf16>
    %c0_4 = arith.constant 0 : index
    %c0_5 = arith.constant 0 : index
    %5 = vector.load %arg5[%c0_4, %c0_5] : memref<32x64xbf16, #tpu.memory_space<vmem>>, vector<32x64xbf16>
    %cst = arith.constant dense<0.000000e+00> : vector<8x64xf32>
    %6 = tpu.matmul %4, %5, %cst {dimension_numbers = #tpu.dot_dimension_numbers<[1], [0], [0], [1], [0, 0, 1, 1], [], []>} : vector<8x32xbf16>, vector<32x64xbf16>, vector<8x64xf32> -> vector<8x64xf32>
    %7 = vector.broadcast %3 : vector<1x64xf32> to vector<8x64xf32>
    %8 = arith.addf %6, %7 : vector<8x64xf32>
    %cst_6 = arith.constant 0.000000e+00 : f32
    %9 = vector.broadcast %cst_6 : f32 to vector<8x64xf32>
    %10 = arith.maximumf %8, %9 : vector<8x64xf32>
    %11 = arith.truncf %10 : vector<8x64xf32> to vector<8x64xbf16>
    %c0_7 = arith.constant 0 : index
    %c0_8 = arith.constant 0 : index
    %12 = vector.load %arg14[%c0_7, %c0_8] : memref<8x32xf32, #tpu.memory_space<vmem>>, vector<8x32xf32>
    %c0_9 = arith.constant 0 : index
    %c0_10 = arith.constant 0 : index
    %13 = vector.load %arg7[%c0_9, %c0_10] : memref<64x32xbf16, #tpu.memory_space<vmem>>, vector<64x32xbf16>
    %cst_11 = arith.constant dense<0.000000e+00> : vector<8x32xf32>
    %14 = tpu.matmul %11, %13, %cst_11 {dimension_numbers = #tpu.dot_dimension_numbers<[1], [0], [0], [1], [0, 0, 1, 1], [], []>} : vector<8x64xbf16>, vector<64x32xbf16>, vector<8x32xf32> -> vector<8x32xf32>
    %15 = arith.addf %12, %14 : vector<8x32xf32>
    %c0_12 = arith.constant 0 : index
    %c0_13 = arith.constant 0 : index
    %16 = vector.load %arg14[%c0_12, %c0_13] : memref<8x32xf32, #tpu.memory_space<vmem>>, vector<8x32xf32>
    tpu.vector_store %arg14[%c0_12, %c0_13], %15 {strides = array<i32>} : memref<8x32xf32, #tpu.memory_space<vmem>>, vector<8x32xf32>,
    %c0_i32_14 = arith.constant 0 : i32
    %17 = arith.cmpi eq, %arg1, %c0_i32_14 : i32
    %18 = arith.extui %17 : i1 to i32
    %c0_i32_15 = arith.constant 0 : i32
    %19 = arith.cmpi ne, %18, %c0_i32_15 : i32
    scf.if %19 {
      %c0_16 = arith.constant 0 : index
      %c0_17 = arith.constant 0 : index
      %20 = vector.load %arg14[%c0_16, %c0_17] : memref<8x32xf32, #tpu.memory_space<vmem>>, vector<8x32xf32>
      %c0_18 = arith.constant 0 : index
      %c0_19 = arith.constant 0 : index
      %21 = vector.load %arg8[%c0_18, %c0_19] : memref<1x32xf32, #tpu.memory_space<vmem>>, vector<1x32xf32>
      %22 = vector.broadcast %21 : vector<1x32xf32> to vector<8x32xf32>
      %23 = arith.addf %20, %22 : vector<8x32xf32>
      %c0_20 = arith.constant 0 : index
      %c0_21 = arith.constant 0 : index
      %24 = vector.load %arg12[%c0_20, %c0_21] : memref<8x32xf32, #tpu.memory_space<vmem>>, vector<8x32xf32>
      %25 = arith.addf %24, %23 : vector<8x32xf32>
      %c0_22 = arith.constant 0 : index
      %c0_23 = arith.constant 0 : index
      %26 = vector.load %arg9[%c0_22, %c0_23] : memref<1x32xf32, #tpu.memory_space<vmem>>, vector<1x32xf32>
      %c0_24 = arith.constant 0 : index
      %c0_25 = arith.constant 0 : index
      %27 = vector.load %arg10[%c0_24, %c0_25] : memref<1x32xf32, #tpu.memory_space<vmem>>, vector<1x32xf32>
      %cst_26 = arith.constant dense<0.000000e+00> : vector<8xf32>
      %28 = vector.multi_reduction <add>, %25, %cst_26 [1] : vector<8x32xf32> to vector<8xf32>
      %29 = vector.shape_cast %28 : vector<8xf32> to vector<8x1xf32>
      %cst_27 = arith.constant 3.200000e+01 : f32
      %30 = vector.broadcast %cst_27 : f32 to vector<8x1xf32>
      %31 = arith.divf %29, %30 : vector<8x1xf32>
      %32 = arith.mulf %25, %25 : vector<8x32xf32>
      %cst_28 = arith.constant dense<0.000000e+00> : vector<8xf32>
      %33 = vector.multi_reduction <add>, %32, %cst_28 [1] : vector<8x32xf32> to vector<8xf32>
      %34 = vector.shape_cast %33 : vector<8xf32> to vector<8x1xf32>
      %cst_29 = arith.constant 3.200000e+01 : f32
      %35 = vector.broadcast %cst_29 : f32 to vector<8x1xf32>
      %36 = arith.divf %34, %35 : vector<8x1xf32>
      %37 = arith.mulf %31, %31 : vector<8x1xf32>
      %38 = arith.subf %36, %37 : vector<8x1xf32>
      %cst_30 = arith.constant 0.000000e+00 : f32
      %39 = vector.broadcast %cst_30 : f32 to vector<8x1xf32>
      %40 = arith.maximumf %38, %39 : vector<8x1xf32>
      %41 = vector.broadcast %31 : vector<8x1xf32> to vector<8x32xf32>
      %42 = arith.subf %25, %41 : vector<8x32xf32>
      %cst_31 = arith.constant 9.99999974E-6 : f32
      %43 = vector.broadcast %cst_31 : f32 to vector<8x1xf32>
      %44 = arith.addf %40, %43 : vector<8x1xf32>
      %45 = math.rsqrt %44 : vector<8x1xf32>
      %46 = vector.broadcast %45 : vector<8x1xf32> to vector<8x32xf32>
      %47 = arith.mulf %42, %46 : vector<8x32xf32>
      %48 = vector.broadcast %26 : vector<1x32xf32> to vector<8x32xf32>
      %49 = arith.mulf %47, %48 : vector<8x32xf32>
      %50 = vector.broadcast %27 : vector<1x32xf32> to vector<8x32xf32>
      %51 = arith.addf %49, %50 : vector<8x32xf32>
      %c0_32 = arith.constant 0 : index
      %c0_33 = arith.constant 0 : index
      %52 = vector.load %arg11[%c0_32, %c0_33] : memref<8x32xf32, #tpu.memory_space<vmem>>, vector<8x32xf32>
      tpu.vector_store %arg11[%c0_32, %c0_33], %51 {strides = array<i32>} : memref<8x32xf32, #tpu.memory_space<vmem>>, vector<8x32xf32>,
    } else {
    }
    return
  }
  func.func @transform_0(%arg0: i32, %arg1: i32) -> (i32, i32) {
    %c0_i32 = arith.constant 0 : i32
    %c0_i32_0 = arith.constant 0 : i32
    return %arg0, %c0_i32 : i32, i32
  }
  func.func @transform_1(%arg0: i32, %arg1: i32) -> (i32, i32) {
    %c0_i32 = arith.constant 0 : i32
    %c0_i32_0 = arith.constant 0 : i32
    %c0_i32_1 = arith.constant 0 : i32
    return %c0_i32, %c0_i32_0 : i32, i32
  }
  func.func @transform_2(%arg0: i32, %arg1: i32) -> (i32, i32) {
    %c0_i32 = arith.constant 0 : i32
    %c0_i32_0 = arith.constant 0 : i32
    %c0_i32_1 = arith.constant 0 : i32
    return %c0_i32, %c0_i32_0 : i32, i32
  }
  func.func @transform_3(%arg0: i32, %arg1: i32) -> (i32, i32) {
    %c0_i32 = arith.constant 0 : i32
    %c0_i32_0 = arith.constant 0 : i32
    return %c0_i32, %arg1 : i32, i32
  }
  func.func @transform_4(%arg0: i32, %arg1: i32) -> (i32, i32) {
    %c0_i32 = arith.constant 0 : i32
    %c0_i32_0 = arith.constant 0 : i32
    return %c0_i32, %arg1 : i32, i32
  }
  func.func @transform_5(%arg0: i32, %arg1: i32) -> (i32, i32) {
    %c0_i32 = arith.constant 0 : i32
    %c0_i32_0 = arith.constant 0 : i32
    return %arg1, %c0_i32 : i32, i32
  }
  func.func @transform_6(%arg0: i32, %arg1: i32) -> (i32, i32) {
    %c0_i32 = arith.constant 0 : i32
    %c0_i32_0 = arith.constant 0 : i32
    %c0_i32_1 = arith.constant 0 : i32
    return %c0_i32, %c0_i32_0 : i32, i32
  }
  func.func @transform_7(%arg0: i32, %arg1: i32) -> (i32, i32) {
    %c0_i32 = arith.constant 0 : i32
    %c0_i32_0 = arith.constant 0 : i32
    %c0_i32_1 = arith.constant 0 : i32
    return %c0_i32, %c0_i32_0 : i32, i32
  }
  func.func @transform_8(%arg0: i32, %arg1: i32) -> (i32, i32) {
    %c0_i32 = arith.constant 0 : i32
    %c0_i32_0 = arith.constant 0 : i32
    %c0_i32_1 = arith.constant 0 : i32
    return %c0_i32, %c0_i32_0 : i32, i32
  }
  func.func @transform_9(%arg0: i32, %arg1: i32) -> (i32, i32) {
    %c0_i32 = arith.constant 0 : i32
    %c0_i32_0 = arith.constant 0 : i32
    return %arg0, %c0_i32 : i32, i32
  }
}

</mosaic_0001>

<llo_original>
// kernel: tpu_custom_call.1
$region0: #{tpu_custom_call.1}
  #allocation0 [shape = 'u32[]', space=smem, size = 0x4, offset = 0x4, fixed_abs, tag = 'smem constant byte address 0x4 - core index']
  #allocation1 [shape = 'u32[144,128]{1,0:T(1,128)}', space=vmem, size = 0x12000, scoped, tag = 'internal scratch']
  #allocation2 [shape = 'f32[8,32]{1,0:T(8,128)}', space=vmem, size = 0x1000, scoped, tag = 'scratch operand']
  #allocation3 [shape = 'bf16[8,32]{1,0:T(8,128)(2,1)}', space=vmem, size = 0x800, scoped, tag = 'scratch operand']
  #allocation4 [shape = 'f32[8,32]{1,0:T(8,128)}', space=vmem, size = 0x1000, scoped, tag = 'scratch operand']
  %s0 = inlined_call_operand.vmem [shape: f32[16,32], index: 0, kind: input, shape index: {}]
  %s1 = inlined_call_operand.vmem [shape: f32[1,32], index: 1, kind: input, shape index: {}]
  %s2 = inlined_call_operand.vmem [shape: f32[1,32], index: 2, kind: input, shape index: {}]
  %s3 = inlined_call_operand.vmem [shape: bf16[32,64], index: 3, kind: input, shape index: {}]
  %s4 = inlined_call_operand.vmem [shape: f32[1,64], index: 4, kind: input, shape index: {}]
  %s5 = inlined_call_operand.vmem [shape: bf16[64,32], index: 5, kind: input, shape index: {}]
  %s6 = inlined_call_operand.vmem [shape: f32[1,32], index: 6, kind: input, shape index: {}]
  %s7 = inlined_call_operand.vmem [shape: f32[1,32], index: 7, kind: input, shape index: {}]
  %s8 = inlined_call_operand.vmem [shape: f32[1,32], index: 8, kind: input, shape index: {}]
  %s9 = inlined_call_operand.hbm [shape: f32[16,32], index: 9, kind: output, shape index: {}]
  %s10 = sld [smem:[#allocation0]]
  $region77: #{tpu_custom_call.1} parent=0
    _
  %s12 = ssub.s32 1, %s10
  %s13 = scalar_select 0, %s12, %s10
  $region1: #{tpu_custom_call.1} parent=0
    #allocation5 [shape = 'u8[8192]{0}', space=vmem, size = 0x2000, scoped, tag = 'output window, operand 0']
    #allocation6 [shape = 's32[2]{0}', space=sflag, size = 0x8, scoped, tag = 'scoped memory for tpu_custom_call.1']
    %14 = vsyncpa [#allocation6], 0
    %s15 = scalar_lea.sflag [#allocation6], 1
    %16 = vsyncpa %s15, 0
    loop: start=0, step=1, limit=4
    $region2: #{tpu_custom_call.1} parent=1 // loop_pre_header
      _
    $region3: #{tpu_custom_call.1} parent=1 // loop_header
      %s18 = sphi 0, %s22
      %p19 = scmp.ge.s32.totalorder %s18, 4
      %s25 = sphi 0, %s37
      %s26 = sphi 0, %s33
      %s27 = sphi 0, %s25
      %s28 = sphi 0, %s26
      %s29 = sphi 0, %s27
      %s30 = sphi 0, %s28
      %s40 = sphi 0, %s42
      %s43 = sphi 0, %s40
      %s44 = sphi 0, %s43
      %s60 = sphi 0, %s44
      %s64 = sphi 0, %s64
      %s66 = sphi 0, %s64
      %s67 = sphi 0, %s66
      %s81 = sphi 0, %s67
      %s85 = sphi 0, %s85
      %s87 = sphi 0, %s85
      %s88 = sphi 0, %s87
      %s102 = sphi 0, %s88
      %s108 = sphi 0, %s110
      %s111 = sphi 0, %s108
      %s112 = sphi 0, %s111
      %s128 = sphi 0, %s112
      %s134 = sphi 0, %s136
      %s137 = sphi 0, %s134
      %s138 = sphi 0, %s137
      %s154 = sphi 0, %s138
      %s160 = sphi 0, %s162
      %s163 = sphi 0, %s160
      %s164 = sphi 0, %s163
      %s180 = sphi 0, %s164
      %s184 = sphi 0, %s184
      %s186 = sphi 0, %s184
      %s187 = sphi 0, %s186
      %s201 = sphi 0, %s187
      %s205 = sphi 0, %s205
      %s207 = sphi 0, %s205
      %s208 = sphi 0, %s207
      %s222 = sphi 0, %s208
      %s226 = sphi 0, %s226
      %s228 = sphi 0, %s226
      %s229 = sphi 0, %s228
      %s243 = sphi 0, %s229
      %s249 = sphi 0, %s251
      %s252 = sphi 0, %s249
      %s253 = sphi 0, %s252
      %s269 = sphi 0, %s253
    $region4: #{tpu_custom_call.1} parent=1 // loop_header_branch
      %21 = sbr.rel (%p19) target = $region8
    $region5: #{tpu_custom_call.1} parent=1 // loop_body
      %s23 = ssub.s32 %s18, 1
      %s24 = ssub.s32 %s18, 2
      %s31 = sadd.s32 1, %s26
      %p32 = scmp.ge.s32.totalorder %s31, 1
      %s33 = scalar_select %p32, 0, %s31
      %s34 = sadd.s32 1, %s25
      %s35 = scalar_select %p32, %s34, %s25
      %p36 = scmp.ge.s32.totalorder %s35, 2
      %s37 = scalar_select %p36, 0, %s35
      %s38 = ssub.s32 %s25, %s37
      %p39 = scmp.eq.s32.totalorder %s38, 0
      %s41 = sadd.s32 %s40, 1
      %s42 = scalar_select %p39, %s40, %s41
      %p45 = pneg %p39
      %p46 = scmp.eq.s32.totalorder %s18, 1
      %p47 = por %p45, %p46
      %p48 = scmp.ne.s32.totalorder %s40, %s43
      %p49 = scmp.eq.s32.totalorder %s18, 0
      %p50 = por %p48, %p49
      %p51 = scmp.ne.s32.totalorder %s40, %s43
      %p52 = scmp.eq.s32.totalorder %s23, 1
      %p53 = por %p51, %p52
      %p54 = scmp.ne.s32.totalorder %s43, %s44
      %p55 = scmp.eq.s32.totalorder %s23, 0
      %p56 = por %p54, %p55
      %p57 = scmp.ne.s32.totalorder %s43, %s44
      %p58 = scmp.eq.s32.totalorder %s24, 1
      %p59 = por %p57, %p58
      %p61 = scmp.ne.s32.totalorder %s44, %s60
      %p62 = scmp.eq.s32.totalorder %s24, 0
      %p63 = por %p61, %p62
      %s65 = sadd.s32 %s64, 1
      %p68 = scmp.eq.s32.totalorder %s18, 1
      %p69 = scmp.ne.s32.totalorder %s64, %s66
      %p70 = scmp.eq.s32.totalorder %s18, 0
      %p71 = por %p69, %p70
      %p72 = scmp.ne.s32.totalorder %s64, %s66
      %p73 = scmp.eq.s32.totalorder %s23, 1
      %p74 = por %p72, %p73
      %p75 = scmp.ne.s32.totalorder %s66, %s67
      %p76 = scmp.eq.s32.totalorder %s23, 0
      %p77 = por %p75, %p76
      %p78 = scmp.ne.s32.totalorder %s66, %s67
      %p79 = scmp.eq.s32.totalorder %s24, 1
      %p80 = por %p78, %p79
      %p82 = scmp.ne.s32.totalorder %s67, %s81
      %p83 = scmp.eq.s32.totalorder %s24, 0
      %p84 = por %p82, %p83
      %s86 = sadd.s32 %s85, 1
      %p89 = scmp.eq.s32.totalorder %s18, 1
      %p90 = scmp.ne.s32.totalorder %s85, %s87
      %p91 = scmp.eq.s32.totalorder %s18, 0
      %p92 = por %p90, %p91
      %p93 = scmp.ne.s32.totalorder %s85, %s87
      %p94 = scmp.eq.s32.totalorder %s23, 1
      %p95 = por %p93, %p94
      %p96 = scmp.ne.s32.totalorder %s87, %s88
      %p97 = scmp.eq.s32.totalorder %s23, 0
      %p98 = por %p96, %p97
      %p99 = scmp.ne.s32.totalorder %s87, %s88
      %p100 = scmp.eq.s32.totalorder %s24, 1
      %p101 = por %p99, %p100
      %p103 = scmp.ne.s32.totalorder %s88, %s102
      %p104 = scmp.eq.s32.totalorder %s24, 0
      %p105 = por %p103, %p104
      %s106 = ssub.s32 %s26, %s33
      %p107 = scmp.eq.s32.totalorder %s106, 0
      %s109 = sadd.s32 %s108, 1
      %s110 = scalar_select %p107, %s108, %s109
      %p113 = pneg %p107
      %p114 = scmp.eq.s32.totalorder %s18, 1
      %p115 = por %p113, %p114
      %p116 = scmp.ne.s32.totalorder %s108, %s111
      %p117 = scmp.eq.s32.totalorder %s18, 0
      %p118 = por %p116, %p117
      %p119 = scmp.ne.s32.totalorder %s108, %s111
      %p120 = scmp.eq.s32.totalorder %s23, 1
      %p121 = por %p119, %p120
      %p122 = scmp.ne.s32.totalorder %s111, %s112
      %p123 = scmp.eq.s32.totalorder %s23, 0
      %p124 = por %p122, %p123
      %p125 = scmp.ne.s32.totalorder %s111, %s112
      %p126 = scmp.eq.s32.totalorder %s24, 1
      %p127 = por %p125, %p126
      %p129 = scmp.ne.s32.totalorder %s112, %s128
      %p130 = scmp.eq.s32.totalorder %s24, 0
      %p131 = por %p129, %p130
      %s132 = ssub.s32 %s26, %s33
      %p133 = scmp.eq.s32.totalorder %s132, 0
      %s135 = sadd.s32 %s134, 1
      %s136 = scalar_select %p133, %s134, %s135
      %p139 = pneg %p133
      %p140 = scmp.eq.s32.totalorder %s18, 1
      %p141 = por %p139, %p140
      %p142 = scmp.ne.s32.totalorder %s134, %s137
      %p143 = scmp.eq.s32.totalorder %s18, 0
      %p144 = por %p142, %p143
      %p145 = scmp.ne.s32.totalorder %s134, %s137
      %p146 = scmp.eq.s32.totalorder %s23, 1
      %p147 = por %p145, %p146
      %p148 = scmp.ne.s32.totalorder %s137, %s138
      %p149 = scmp.eq.s32.totalorder %s23, 0
      %p150 = por %p148, %p149
      %p151 = scmp.ne.s32.totalorder %s137, %s138
      %p152 = scmp.eq.s32.totalorder %s24, 1
      %p153 = por %p151, %p152
      %p155 = scmp.ne.s32.totalorder %s138, %s154
      %p156 = scmp.eq.s32.totalorder %s24, 0
      %p157 = por %p155, %p156
      %s158 = ssub.s32 %s26, %s33
      %p159 = scmp.eq.s32.totalorder %s158, 0
      %s161 = sadd.s32 %s160, 1
      %s162 = scalar_select %p159, %s160, %s161
      %p165 = pneg %p159
      %p166 = scmp.eq.s32.totalorder %s18, 1
      %p167 = por %p165, %p166
      %p168 = scmp.ne.s32.totalorder %s160, %s163
      %p169 = scmp.eq.s32.totalorder %s18, 0
      %p170 = por %p168, %p169
      %p171 = scmp.ne.s32.totalorder %s160, %s163
      %p172 = scmp.eq.s32.totalorder %s23, 1
      %p173 = por %p171, %p172
      %p174 = scmp.ne.s32.totalorder %s163, %s164
      %p175 = scmp.eq.s32.totalorder %s23, 0
      %p176 = por %p174, %p175
      %p177 = scmp.ne.s32.totalorder %s163, %s164
      %p178 = scmp.eq.s32.totalorder %s24, 1
      %p179 = por %p177, %p178
      %p181 = scmp.ne.s32.totalorder %s164, %s180
      %p182 = scmp.eq.s32.totalorder %s24, 0
      %p183 = por %p181, %p182
      %s185 = sadd.s32 %s184, 1
      %p188 = scmp.eq.s32.totalorder %s18, 1
      %p189 = scmp.ne.s32.totalorder %s184, %s186
      %p190 = scmp.eq.s32.totalorder %s18, 0
      %p191 = por %p189, %p190
      %p192 = scmp.ne.s32.totalorder %s184, %s186
      %p193 = scmp.eq.s32.totalorder %s23, 1
      %p194 = por %p192, %p193
      %p195 = scmp.ne.s32.totalorder %s186, %s187
      %p196 = scmp.eq.s32.totalorder %s23, 0
      %p197 = por %p195, %p196
      %p198 = scmp.ne.s32.totalorder %s186, %s187
      %p199 = scmp.eq.s32.totalorder %s24, 1
      %p200 = por %p198, %p199
      %p202 = scmp.ne.s32.totalorder %s187, %s201
      %p203 = scmp.eq.s32.totalorder %s24, 0
      %p204 = por %p202, %p203
      %s206 = sadd.s32 %s205, 1
      %p209 = scmp.eq.s32.totalorder %s18, 1
      %p210 = scmp.ne.s32.totalorder %s205, %s207
      %p211 = scmp.eq.s32.totalorder %s18, 0
      %p212 = por %p210, %p211
      %p213 = scmp.ne.s32.totalorder %s205, %s207
      %p214 = scmp.eq.s32.totalorder %s23, 1
      %p215 = por %p213, %p214
      %p216 = scmp.ne.s32.totalorder %s207, %s208
      %p217 = scmp.eq.s32.totalorder %s23, 0
      %p218 = por %p216, %p217
      %p219 = scmp.ne.s32.totalorder %s207, %s208
      %p220 = scmp.eq.s32.totalorder %s24, 1
      %p221 = por %p219, %p220
      %p223 = scmp.ne.s32.totalorder %s208, %s222
      %p224 = scmp.eq.s32.totalorder %s24, 0
      %p225 = por %p223, %p224
      %s227 = sadd.s32 %s226, 1
      %p230 = scmp.eq.s32.totalorder %s18, 1
      %p231 = scmp.ne.s32.totalorder %s226, %s228
      %p232 = scmp.eq.s32.totalorder %s18, 0
      %p233 = por %p231, %p232
      %p234 = scmp.ne.s32.totalorder %s226, %s228
      %p235 = scmp.eq.s32.totalorder %s23, 1
      %p236 = por %p234, %p235
      %p237 = scmp.ne.s32.totalorder %s228, %s229
      %p238 = scmp.eq.s32.totalorder %s23, 0
      %p239 = por %p237, %p238
      %p240 = scmp.ne.s32.totalorder %s228, %s229
      %p241 = scmp.eq.s32.totalorder %s24, 1
      %p242 = por %p240, %p241
      %p244 = scmp.ne.s32.totalorder %s229, %s243
      %p245 = scmp.eq.s32.totalorder %s24, 0
      %p246 = por %p244, %p245
      %s247 = ssub.s32 %s25, %s37
      %p248 = scmp.eq.s32.totalorder %s247, 0
      %s250 = sadd.s32 %s249, 1
      %s251 = scalar_select %p248, %s249, %s250
      %p254 = pneg %p248
      %p255 = scmp.eq.s32.totalorder %s18, 1
      %p256 = por %p254, %p255
      %p257 = scmp.ne.s32.totalorder %s249, %s252
      %p258 = scmp.eq.s32.totalorder %s18, 0
      %p259 = por %p257, %p258
      %p260 = scmp.ne.s32.totalorder %s249, %s252
      %p261 = scmp.eq.s32.totalorder %s23, 1
      %p262 = por %p260, %p261
      %p263 = scmp.ne.s32.totalorder %s252, %s253
      %p264 = scmp.eq.s32.totalorder %s23, 0
      %p265 = por %p263, %p264
      %p266 = scmp.ne.s32.totalorder %s252, %s253
      %p267 = scmp.eq.s32.totalorder %s24, 1
      %p268 = por %p266, %p267
      %p270 = scmp.ne.s32.totalorder %s253, %s269
      %p271 = scmp.eq.s32.totalorder %s24, 0
      %p272 = por %p270, %p271
      %p273 = scmp.le.s32.totalorder 1, %s18
      %p274 = scmp.lt.s32.totalorder %s18, 3
      %p275 = pnand %p273, %p274
      %p276 = pneg %p275
      // Predicated region
      $region9: #{tpu_custom_call.1} parent=5 // pred_check
        _
      $region10: #{tpu_custom_call.1} parent=5 // pred_check_branch
        %278 = sbr.rel (%p275) target = $region12
      $region11: #{tpu_custom_call.1} parent=5 // pred_region
        %s279 = ssub.s32 %s18, 1
        // Predicated region
        $region13: #{tpu_custom_call.1} parent=11 // pred_check
          %p280 = pneg %p77
        $region14: #{tpu_custom_call.1} parent=11 // pred_check_branch
          %282 = sbr.rel (%p280) target = $region16
        $region15: #{tpu_custom_call.1} parent=11 // pred_region
          _
        $region16: #{tpu_custom_call.1} parent=11 // pred_fallthru
          _
        // Predicated region
        $region17: #{tpu_custom_call.1} parent=11 // pred_check
          %p283 = pneg %p98
        $region18: #{tpu_custom_call.1} parent=11 // pred_check_branch
          %285 = sbr.rel (%p283) target = $region20
        $region19: #{tpu_custom_call.1} parent=11 // pred_region
          _
        $region20: #{tpu_custom_call.1} parent=11 // pred_fallthru
          _
        // Predicated region
        $region21: #{tpu_custom_call.1} parent=11 // pred_check
          %p286 = pneg %p124
        $region22: #{tpu_custom_call.1} parent=11 // pred_check_branch
          %288 = sbr.rel (%p286) target = $region24
        $region23: #{tpu_custom_call.1} parent=11 // pred_region
          %p289 = scmp.lt.s32.totalorder %s28, 0
          %s290 = scalar_select %p289, %s28, 0
          %s291 = smul.addr %s290, 4
          %s292 = scalar_lea.vmem %s3, %s291
        $region24: #{tpu_custom_call.1} parent=11 // pred_fallthru
          _
        // Predicated region
        $region25: #{tpu_custom_call.1} parent=11 // pred_check
          %p293 = pneg %p150
        $region26: #{tpu_custom_call.1} parent=11 // pred_check_branch
          %295 = sbr.rel (%p293) target = $region28
        $region27: #{tpu_custom_call.1} parent=11 // pred_region
          %p296 = scmp.lt.s32.totalorder %s28, 0
          %s297 = scalar_select %p296, %s28, 0
          %s298 = scalar_lea.vmem %s4, %s297
        $region28: #{tpu_custom_call.1} parent=11 // pred_fallthru
          _
        // Predicated region
        $region29: #{tpu_custom_call.1} parent=11 // pred_check
          %p299 = pneg %p176
        $region30: #{tpu_custom_call.1} parent=11 // pred_check_branch
          %301 = sbr.rel (%p299) target = $region32
        $region31: #{tpu_custom_call.1} parent=11 // pred_region
          %s302 = smul.u32 8, %s28
          %p303 = scmp.lt.s32.totalorder %s302, 7
          %s304 = scalar_select %p303, %s302, 7
          %s305 = smul.addr %s304, 4
          %s306 = scalar_lea.vmem %s5, %s305
          %s307 = smul.u32 8, %s28
        $region32: #{tpu_custom_call.1} parent=11 // pred_fallthru
          _
        // Predicated region
        $region33: #{tpu_custom_call.1} parent=11 // pred_check
          %p308 = pneg %p197
        $region34: #{tpu_custom_call.1} parent=11 // pred_check_branch
          %310 = sbr.rel (%p308) target = $region36
        $region35: #{tpu_custom_call.1} parent=11 // pred_region
          _
        $region36: #{tpu_custom_call.1} parent=11 // pred_fallthru
          _
        // Predicated region
        $region37: #{tpu_custom_call.1} parent=11 // pred_check
          %p311 = pneg %p218
        $region38: #{tpu_custom_call.1} parent=11 // pred_check_branch
          %313 = sbr.rel (%p311) target = $region40
        $region39: #{tpu_custom_call.1} parent=11 // pred_region
          _
        $region40: #{tpu_custom_call.1} parent=11 // pred_fallthru
          _
        // Predicated region
        $region41: #{tpu_custom_call.1} parent=11 // pred_check
          %p314 = pneg %p239
        $region42: #{tpu_custom_call.1} parent=11 // pred_check_branch
          %316 = sbr.rel (%p314) target = $region44
        $region43: #{tpu_custom_call.1} parent=11 // pred_region
          _
        $region44: #{tpu_custom_call.1} parent=11 // pred_fallthru
          _
      $region12: #{tpu_custom_call.1} parent=5 // pred_fallthru
        _
      %p317 = scmp.lt.s32.totalorder %s18, 2
      // Predicated region
      $region45: #{tpu_custom_call.1} parent=5 // pred_check
        %p318 = pneg %p317
      $region46: #{tpu_custom_call.1} parent=5 // pred_check_branch
        %320 = sbr.rel (%p318) target = $region48
      $region47: #{tpu_custom_call.1} parent=5 // pred_region
        // Predicated region
        $region49: #{tpu_custom_call.1} parent=47 // pred_check
          %p321 = pneg %p50
        $region50: #{tpu_custom_call.1} parent=47 // pred_check_branch
          %323 = sbr.rel (%p321) target = $region52
        $region51: #{tpu_custom_call.1} parent=47 // pred_region
          %p324 = scmp.lt.s32.totalorder %s25, 1
          %s325 = scalar_select %p324, %s25, 1
          %s326 = smul.addr %s325, 8
          %s327 = scalar_lea.vmem %s0, %s326
        $region52: #{tpu_custom_call.1} parent=47 // pred_fallthru
          _
      $region48: #{tpu_custom_call.1} parent=5 // pred_fallthru
        _
      %p328 = scmp.le.s32.totalorder 1, %s18
      %p329 = scmp.lt.s32.totalorder %s18, 3
      %p330 = pnand %p328, %p329
      %p331 = pneg %p330
      // Predicated region
      $region53: #{tpu_custom_call.1} parent=5 // pred_check
        _
      $region54: #{tpu_custom_call.1} parent=5 // pred_check_branch
        %333 = sbr.rel (%p330) target = $region56
      $region55: #{tpu_custom_call.1} parent=5 // pred_region
        %s334 = ssub.s32 %s18, 1
        %p335 = scmp.lt.s32.totalorder %s27, 1
        %s336 = scalar_select %p335, %s27, 1
        %s337 = smul.addr %s336, 8
        %s338 = scalar_lea.vmem %s0, %s337
        %p339 = pneg %p56
        %p340 = pneg %p53
        %p341 = pneg %p77
        %p342 = pneg %p74
        %p343 = pneg %p98
        %p344 = pneg %p95
        %p345 = scmp.lt.s32.totalorder %s28, 0
        %s346 = scalar_select %p345, %s28, 0
        %s347 = smul.addr %s346, 4
        %s348 = scalar_lea.vmem %s3, %s347
        %p349 = pneg %p124
        %p350 = pneg %p121
        %p351 = scmp.lt.s32.totalorder %s28, 0
        %s352 = scalar_select %p351, %s28, 0
        %s353 = scalar_lea.vmem %s4, %s352
        %p354 = pneg %p150
        %p355 = pneg %p147
        %s356 = smul.u32 8, %s28
        %p357 = scmp.lt.s32.totalorder %s356, 7
        %s358 = scalar_select %p357, %s356, 7
        %s359 = smul.addr %s358, 4
        %s360 = scalar_lea.vmem %s5, %s359
        %p361 = pneg %p176
        %p362 = pneg %p173
        %p363 = pneg %p197
        %p364 = pneg %p194
        %p365 = pneg %p218
        %p366 = pneg %p215
        %p367 = pneg %p239
        %p368 = pneg %p236
        %p369 = pneg %p265
        %p370 = pneg %p262
        %s371 = sand.u32 %s252, 1
        %s372 = scalar_lea.sflag [#allocation6], %s371
        %s373 = sand.u32 %s252, 1
        %s374 = smul.addr %s373, 8
        %s375 = scalar_lea.vmem [#allocation5], %s374
        %p376 = scmp.lt.s32.totalorder %s27, 1
        %s377 = scalar_select %p376, %s27, 1
        %s378 = smul.addr %s377, 8
        %s379 = scalar_lea.vmem %s0, %s378
        %p380 = scmp.lt.s32.totalorder %s28, 0
        %s381 = scalar_select %p380, %s28, 0
        %s382 = smul.addr %s381, 4
        %s383 = scalar_lea.vmem %s3, %s382
        %p384 = scmp.lt.s32.totalorder %s28, 0
        %s385 = scalar_select %p384, %s28, 0
        %s386 = scalar_lea.vmem %s4, %s385
        %s387 = smul.u32 8, %s28
        %p388 = scmp.lt.s32.totalorder %s387, 7
        %s389 = scalar_select %p388, %s387, 7
        %s390 = smul.addr %s389, 4
        %s391 = scalar_lea.vmem %s5, %s390
        %s392 = smul.u32 8, %s28
        %p394 = scmp.eq.s32.totalorder %s28, 0
        // Predicated region
        $region57: #{tpu_custom_call.1} parent=55 // pred_check
          %p395 = pneg %p394
        $region58: #{tpu_custom_call.1} parent=55 // pred_check_branch
          %397 = sbr.rel (%p395) target = $region60
        $region59: #{tpu_custom_call.1} parent=55 // pred_region
          %v398 = vld [vmem:[%s379] sm:$0xff]
          %v399 = vld [vmem:[%s1] sm:$0x1]
          %v400 = vld [vmem:[%s2] sm:$0x1]
          %vm401 = vcmask 261120
          %v402 = vsel %vm401, %v398, 0.0
          %403 = vadd.xlane.f32.xlu0 %v402
          %v404 = vpop.xlane.xlu0 %403
          %v405 = vrcp.pop 32.0
          %v406 = vmul.f32 %v404, %v405
          %v407 = vmul.f32 %v398, %v398
          %v408 = vsel %vm401, %v407, 0.0
          %409 = vadd.xlane.f32.xlu0 %v408
          %v410 = vpop.xlane.xlu0 %409
          %v411 = vmul.f32 %v410, %v405
          %v412 = vmul.f32 %v406, %v406
          %v413 = vsub.f32 %v411, %v412
          %v414 = vmax.f32 %v413, 0.0
          %v415 = vsub.f32 %v398, %v406
          %v416 = vadd.f32 %v414, 1e-05
          %v417 = vrsqrt.pop %v416
          %v418 = vmul.f32 %v415, %v417
          %v420 = vlaneseq
          %v421 = vshrl.u32 %v420, 7
          %v422 = vsub.s32 0, %v421
          %v423 = vrot.slane %v399, %v422
          %v425 = vmul.f32 %v418, %v423
          %v427 = vlaneseq
          %v428 = vshrl.u32 %v427, 7
          %v429 = vsub.s32 0, %v428
          %v430 = vrot.slane %v400, %v429
          %v432 = vadd.f32 %v425, %v430
          %433 = vst.msk [vmem:[#allocation2] sm:$0xff] %vm401, %v432
          %v434 = vpack.c.bf16 %v432, %v432
          %vm435 = vcmask 257024
          %436 = vst.msk [vmem:[#allocation3] sm:$0xf] %vm435, %v434
          %437 = vst.msk [vmem:[#allocation4] sm:$0xff] %vm401, 0.0
        $region60: #{tpu_custom_call.1} parent=55 // pred_fallthru
          _
        %v438 = vld [vmem:[%s386] sm:$0x1]
        %v439 = vld [vmem:[#allocation3] sm:$0xf]
        %v440 = vld [vmem:[%s383] sm:$0xf]
        %v441 = vld [vmem:[%s383 + $0x4] sm:$0xf]
        %v442 = vld [vmem:[%s383 + $0x8] sm:$0xf]
        %v443 = vld [vmem:[%s383 + $0xc] sm:$0xf]
        %v445 = vlaneseq
        %v446 = vshrl.u32 %v445, 7
        %v447 = vsub.s32 0, %v446
        %v448 = vrot.slane %v438, %v447
        %v454 = vunpack.c.l.b16 %v440
        %v455 = vunpack.c.l.b16 %v441
        %v456 = vunpack.c.l.b16 %v442
        %v457 = vunpack.c.l.b16 %v443
        %v458 = vpack.c.b16 %v455, %v454
        %v459 = vpack.c.b16 %v457, %v456
        %vm462 = vcmask 261120
        %v464 = vsel %vm462, %v439, 0
        %466 = vmatprep.subr.bf16.mxu0 0
        %467 = vmatpush1.bf16.msra.mxu0 %v458
        %468 = vmatprep.subr.bf16.mxu0 0
        %469 = vmatpush1.bf16.msra.mxu0 %v459
        %470 = vmatprep.subr.bf16.mxu0 0
        %471 = vmatpush1.bf16.msra.mxu0 0
        %472 = vmatprep.subr.bf16.mxu0 0
        %473 = vmatpush1.bf16.msra.mxu0 0
        %474 = vmatprep.subr.bf16.mxu0 0
        %475 = vmatpush1.bf16.msra.mxu0 0
        %476 = vmatprep.subr.bf16.mxu0 0
        %477 = vmatpush1.bf16.msra.mxu0 0
        %478 = vmatprep.subr.bf16.mxu0 0
        %479 = vmatpush1.bf16.msra.mxu0 0
        %480 = vmatprep.subr.bf16.mxu0 0
        %481 = vmatpush1.bf16.msra.mxu0 0
        %482 = vmatprep.subr.bf16.mxu0 0
        %483 = vmatpush1.bf16.msra.mxu0 0
        %484 = vmatprep.subr.bf16.mxu0 0
        %485 = vmatpush1.bf16.msra.mxu0 0
        %486 = vmatprep.subr.bf16.mxu0 0
        %487 = vmatpush1.bf16.msra.mxu0 0
        %488 = vmatprep.subr.bf16.mxu0 0
        %489 = vmatpush1.bf16.msra.mxu0 0
        %490 = vmatprep.subr.bf16.mxu0 0
        %491 = vmatpush1.bf16.msra.mxu0 0
        %492 = vmatprep.subr.bf16.mxu0 0
        %493 = vmatpush1.bf16.msra.mxu0 0
        %494 = vmatprep.subr.bf16.mxu0 0
        %495 = vmatpush1.bf16.msra.mxu0 0
        %496 = vmatprep.subr.bf16.mxu0 0
        %497 = vmatpush1.bf16.msra.mxu0 0
        %498 = vmatprep.mubr.bf16.mxu0 0
        %499 = vmatmul.mubr.bf16.gmra.mrb[0].mxu0 %v464
        %v500 = vpop.f32.mrb[0].mxu0
        %v501 = vadd.f32 %v448, %v500
        %v502 = vpop.f32.mrb[0].mxu0
        %v503 = vpop.f32.mrb[0].mxu0
        %v504 = vpop.f32.mrb[0].mxu0
        %505 = vdwg.mxu0
        %v506 = vmax.f32 %v501, 0.0
        %v507 = vpack.c.bf16 %v506, %v506
        %v508 = vld [vmem:[#allocation4] sm:$0xff]
        %v509 = vld [vmem:[%s391] sm:$0xf]
        %v510 = vld [vmem:[%s391 + $0x4] sm:$0xf]
        %v511 = vld [vmem:[%s391 + $0x8] sm:$0xf]
        %v512 = vld [vmem:[%s391 + $0xc] sm:$0xf]
        %v513 = vld [vmem:[%s391 + $0x10] sm:$0xf]
        %v514 = vld [vmem:[%s391 + $0x14] sm:$0xf]
        %v515 = vld [vmem:[%s391 + $0x18] sm:$0xf]
        %v516 = vld [vmem:[%s391 + $0x1c] sm:$0xf]
        %v525 = vunpack.c.l.b16 %v509
        %v526 = vunpack.c.l.b16 %v510
        %v527 = vunpack.c.l.b16 %v511
        %v528 = vunpack.c.l.b16 %v512
        %v529 = vunpack.c.l.b16 %v513
        %v530 = vunpack.c.l.b16 %v514
        %v531 = vunpack.c.l.b16 %v515
        %v532 = vunpack.c.l.b16 %v516
        %v533 = vpack.c.b16 %v526, %v525
        %v534 = vpack.c.b16 %v528, %v527
        %v535 = vpack.c.b16 %v530, %v529
        %v536 = vpack.c.b16 %v532, %v531
        %vm541 = vcmask 523264
        %v543 = vsel %vm541, %v507, 0
        %545 = vmatprep.subr.bf16.mxu0 0
        %546 = vmatpush1.bf16.msra.mxu0 %v533
        %547 = vmatprep.subr.bf16.mxu0 0
        %548 = vmatpush1.bf16.msra.mxu0 %v534
        %549 = vmatprep.subr.bf16.mxu0 0
        %550 = vmatpush1.bf16.msra.mxu0 %v535
        %551 = vmatprep.subr.bf16.mxu0 0
        %552 = vmatpush1.bf16.msra.mxu0 %v536
        %553 = vmatprep.subr.bf16.mxu0 0
        %554 = vmatpush1.bf16.msra.mxu0 0
        %555 = vmatprep.subr.bf16.mxu0 0
        %556 = vmatpush1.bf16.msra.mxu0 0
        %557 = vmatprep.subr.bf16.mxu0 0
        %558 = vmatpush1.bf16.msra.mxu0 0
        %559 = vmatprep.subr.bf16.mxu0 0
        %560 = vmatpush1.bf16.msra.mxu0 0
        %561 = vmatprep.subr.bf16.mxu0 0
        %562 = vmatpush1.bf16.msra.mxu0 0
        %563 = vmatprep.subr.bf16.mxu0 0
        %564 = vmatpush1.bf16.msra.mxu0 0
        %565 = vmatprep.subr.bf16.mxu0 0
        %566 = vmatpush1.bf16.msra.mxu0 0
        %567 = vmatprep.subr.bf16.mxu0 0
        %568 = vmatpush1.bf16.msra.mxu0 0
        %569 = vmatprep.subr.bf16.mxu0 0
        %570 = vmatpush1.bf16.msra.mxu0 0
        %571 = vmatprep.subr.bf16.mxu0 0
        %572 = vmatpush1.bf16.msra.mxu0 0
        %573 = vmatprep.subr.bf16.mxu0 0
        %574 = vmatpush1.bf16.msra.mxu0 0
        %575 = vmatprep.subr.bf16.mxu0 0
        %576 = vmatpush1.bf16.msra.mxu0 0
        %577 = vmatprep.mubr.bf16.mxu0 0
        %578 = vmatmul.mubr.bf16.gmra.mrb[0].mxu0 %v543
        %v579 = vpop.f32.mrb[0].mxu0
        %v580 = vadd.f32 0.0, %v579
        %v581 = vpop.f32.mrb[0].mxu0
        %v582 = vpop.f32.mrb[0].mxu0
        %v583 = vpop.f32.mrb[0].mxu0
        %584 = vdwg.mxu0
        %v585 = vadd.f32 %v508, %v580
        %586 = vst.msk [vmem:[#allocation4] sm:$0xff] %vm462, %v585
        // Predicated region
        $region61: #{tpu_custom_call.1} parent=55 // pred_check
          %p587 = pneg %p394
        $region62: #{tpu_custom_call.1} parent=55 // pred_check_branch
          %589 = sbr.rel (%p587) target = $region64
        $region63: #{tpu_custom_call.1} parent=55 // pred_region
          %v590 = vld [vmem:[#allocation4] sm:$0xff]
          %v591 = vld [vmem:[%s6] sm:$0x1]
          %v593 = vlaneseq
          %v594 = vshrl.u32 %v593, 7
          %v595 = vsub.s32 0, %v594
          %v596 = vrot.slane %v591, %v595
          %v598 = vadd.f32 %v590, %v596
          %v599 = vld [vmem:[#allocation2] sm:$0xff]
          %v600 = vadd.f32 %v599, %v598
          %v601 = vld [vmem:[%s7] sm:$0x1]
          %v602 = vld [vmem:[%s8] sm:$0x1]
          %v603 = vsel %vm462, %v600, 0.0
          %604 = vadd.xlane.f32.xlu0 %v603
          %v605 = vpop.xlane.xlu0 %604
          %v606 = vrcp.pop 32.0
          %v607 = vmul.f32 %v605, %v606
          %v608 = vmul.f32 %v600, %v600
          %v609 = vsel %vm462, %v608, 0.0
          %610 = vadd.xlane.f32.xlu0 %v609
          %v611 = vpop.xlane.xlu0 %610
          %v612 = vmul.f32 %v611, %v606
          %v613 = vmul.f32 %v607, %v607
          %v614 = vsub.f32 %v612, %v613
          %v615 = vmax.f32 %v614, 0.0
          %v616 = vsub.f32 %v600, %v607
          %v617 = vadd.f32 %v615, 1e-05
          %v618 = vrsqrt.pop %v617
          %v619 = vmul.f32 %v616, %v618
          %v621 = vlaneseq
          %v622 = vshrl.u32 %v621, 7
          %v623 = vsub.s32 0, %v622
          %v624 = vrot.slane %v601, %v623
          %v626 = vmul.f32 %v619, %v624
          %v628 = vlaneseq
          %v629 = vshrl.u32 %v628, 7
          %v630 = vsub.s32 0, %v629
          %v631 = vrot.slane %v602, %v630
          %v633 = vadd.f32 %v626, %v631
          %634 = vst.msk [vmem:[%s375] sm:$0xff] %vm462, %v633
        $region64: #{tpu_custom_call.1} parent=55 // pred_fallthru
          _
        %s635 = sand.u32 %s252, 1
        %s636 = scalar_lea.sflag [#allocation6], %s635
        %s637 = sand.u32 %s252, 1
        %s638 = smul.addr %s637, 8
        %s639 = scalar_lea.vmem [#allocation5], %s638
        // Predicated region
        $region65: #{tpu_custom_call.1} parent=55 // pred_check
          %p640 = pneg %p262
        $region66: #{tpu_custom_call.1} parent=55 // pred_check_branch
          %642 = sbr.rel (%p640) target = $region68
        $region67: #{tpu_custom_call.1} parent=55 // pred_region
          %s644 = ssub.s32 128, 128
          %645 = vsyncadd %s636, %s644
          %s646 = smul.addr %s27, 128
          %s647 = scalar_lea.hbm %s9, %s646
          %s649 = sshll.u32 %s639, 4
          %s650 = int_to_ptr.vmem [resolvable:$true] %s649
          %652 = dma.vmem_to_hbm [thread:$0]  %s650, 128, %s647, %s636
        $region68: #{tpu_custom_call.1} parent=55 // pred_fallthru
          _
      $region56: #{tpu_custom_call.1} parent=5 // pred_fallthru
        _
      %p653 = scmp.le.s32.totalorder 2, %s18
      // Predicated region
      $region69: #{tpu_custom_call.1} parent=5 // pred_check
        %p654 = pneg %p653
      $region70: #{tpu_custom_call.1} parent=5 // pred_check_branch
        %656 = sbr.rel (%p654) target = $region72
      $region71: #{tpu_custom_call.1} parent=5 // pred_region
        %s657 = ssub.s32 %s18, 2
        // Predicated region
        $region73: #{tpu_custom_call.1} parent=71 // pred_check
          %p658 = pneg %p268
        $region74: #{tpu_custom_call.1} parent=71 // pred_check_branch
          %660 = sbr.rel (%p658) target = $region76
        $region75: #{tpu_custom_call.1} parent=71 // pred_region
          %s661 = sand.u32 %s253, 1
          %s662 = scalar_lea.sflag [#allocation6], %s661
          %s663 = sand.u32 %s253, 1
          %s664 = smul.addr %s663, 8
          %s665 = scalar_lea.vmem [#allocation5], %s664
          %666 = dma.done %s662, 128
        $region76: #{tpu_custom_call.1} parent=71 // pred_fallthru
          _
      $region72: #{tpu_custom_call.1} parent=5 // pred_fallthru
        _
    $region6: #{tpu_custom_call.1} parent=1 // loop_footer
      %s22 = sadd.s32 1, %s18
    $region7: #{tpu_custom_call.1} parent=1 // loop_footer_branch
      %17 = sbr.rel target = $region3
    $region8: #{tpu_custom_call.1} parent=1 // loop_exit
      _
    %667 = vsyncpa [#allocation6], 1
    %s668 = scalar_lea.sflag [#allocation6], 1
    %669 = vsyncpa %s668, 1

</llo_original>
